<compile_context>
chip_gen: v6e
topology: v6e:2x2x1
jax: 0.10.0
libtpu: 0.0.40
codegen_flags: <defaults>
</compile_context>

<pallas_src>
import functools

import jax
import jax.numpy as jnp
from jax.experimental import pallas as pl
from jax.experimental.pallas import tpu as pltpu


IGNORE_INDEX = -100


def _ce_kernel(logits_ref, target_ref, weight_ref, loss_ref, wsum_ref, *,
               ignore_index, hw):
    t_idx = pl.program_id(1)

    x = logits_ref[...].astype(jnp.float32)          # (1, C, T)  pixels on lanes
    tgt = target_ref[...]                            # (1, 1, T)  int32
    num_classes = x.shape[1]
    tile = x.shape[-1]

    # Numerically-stable log-sum-exp over the (small) class / sublane axis.
    m = jnp.max(x, axis=1, keepdims=True)                               # (1,1,T)
    lse = m + jnp.log(jnp.sum(jnp.exp(x - m), axis=1, keepdims=True))   # (1,1,T)

    # logit[target] via compare-select over the class axis (no gather).
    cls_ids = jax.lax.broadcasted_iota(jnp.int32, x.shape, 1)           # (1,C,T)
    hit = cls_ids == tgt                                                # (1,C,T)
    picked = jnp.sum(jnp.where(hit, x, 0.0), axis=1, keepdims=True)     # (1,1,T)

    # Per-pixel class weight: C scalar reads from SMEM + lane-dense selects.
    w_t = jnp.zeros(tgt.shape, jnp.float32)
    for c in range(num_classes):
        w_t = jnp.where(tgt == c, weight_ref[c], w_t)

    # Valid = not ignore_index AND inside the real (un-padded) pixel range.
    pix = t_idx * tile + jax.lax.broadcasted_iota(jnp.int32, tgt.shape, 2)
    valid = (tgt != ignore_index) & (pix < hw)

    nll = lse - picked                                                  # (1,1,T)
    loss_part = jnp.where(valid, w_t * nll, 0.0)
    wsum_part = jnp.where(valid, w_t, 0.0)

    @pl.when(t_idx == 0)
    def _():
        loss_ref[...] = jnp.zeros_like(loss_ref)
        wsum_ref[...] = jnp.zeros_like(wsum_ref)

    loss_ref[...] += loss_part
    wsum_ref[...] += wsum_part


def _pick_tile_hw(hw, num_classes, itemsize):
    """Largest lane tile (multiple of 128, <= hw) whose logits block stays
    ~<= 2 MiB so double-buffered inputs fit every TPU's scoped VMEM budget."""
    if hw <= 128:
        return hw                      # full-extent block (allowed even if <128)
    budget = 2 * 1024 * 1024
    max_lanes = max(128, (budget // max(1, num_classes * itemsize)) // 128 * 128)
    return min(max_lanes, 8192, (hw // 128) * 128)


def ce_loss(output, target, weight, *, ignore_index=IGNORE_INDEX, tile_hw=None):
    """Equivalent of CELoss.forward(output, target).

    output: (N, C, H, W) logits (any float dtype; cast to f32 inside kernel)
    target: (N, 1, H, W) integer class ids (ignore_index allowed)
    weight: (C,) per-class weights
    """
    N, C, H, W = output.shape
    hw = H * W

    # Metadata-only reshapes: no transpose, no pad, no extra HBM passes.
    logits3 = output.reshape(N, C, hw)
    tgt3 = target.reshape(N, 1, hw).astype(jnp.int32)
    weight1d = jnp.asarray(weight, jnp.float32).reshape(C)

    if tile_hw is None:
        tile_hw = _pick_tile_hw(hw, C, jnp.dtype(output.dtype).itemsize)
    num_t = pl.cdiv(hw, tile_hw)

    kernel = functools.partial(_ce_kernel, ignore_index=ignore_index, hw=hw)

    loss_vec, wsum_vec = pl.pallas_call(
        kernel,
        out_shape=(jax.ShapeDtypeStruct((N, 1, tile_hw), jnp.float32),
                   jax.ShapeDtypeStruct((N, 1, tile_hw), jnp.float32)),
        grid=(N, num_t),
        in_specs=[
            pl.BlockSpec((1, C, tile_hw), lambda n, t: (n, 0, t)),
            pl.BlockSpec((1, 1, tile_hw), lambda n, t: (n, 0, t)),
            pl.BlockSpec(memory_space=pltpu.MemorySpace.SMEM),
        ],
        out_specs=(
            pl.BlockSpec((1, 1, tile_hw), lambda n, t: (n, 0, 0)),
            pl.BlockSpec((1, 1, tile_hw), lambda n, t: (n, 0, 0)),
        ),
        compiler_params=pltpu.CompilerParams(
            dimension_semantics=("parallel", "arbitrary")),
    )(logits3, tgt3, weight1d)

    # reduction='mean' with weights: sum(w_y * nll) / sum(w_y) over valid pixels.
    return jnp.sum(loss_vec) / jnp.sum(wsum_vec)


def _ce_loss_reference(output, target, weight, ignore_index=IGNORE_INDEX):
    """Pure-JAX reference matching torch.nn.CrossEntropyLoss semantics."""
    N, C, H, W = output.shape
    logits = jnp.transpose(output, (0, 2, 3, 1)).reshape(-1, C).astype(jnp.float32)
    tgt = target.reshape(-1).astype(jnp.int32)
    lse = jax.nn.logsumexp(logits, axis=-1)
    safe_t = jnp.where(tgt == ignore_index, 0, tgt)
    picked = jnp.take_along_axis(logits, safe_t[:, None], axis=-1)[:, 0]
    nll = lse - picked
    w_t = jnp.asarray(weight, jnp.float32)[safe_t]
    valid = tgt != ignore_index
    num = jnp.sum(jnp.where(valid, w_t * nll, 0.0))
    den = jnp.sum(jnp.where(valid, w_t, 0.0))
    return num / den


if __name__ == "__main__":
    # Case 1: module defaults -- 2 classes, weight=[1, 1], some ignore pixels.
    k1, k2, k3 = jax.random.split(jax.random.PRNGKey(0), 3)
    N, C, H, W = 2, 2, 16, 16
    output = jax.random.normal(k1, (N, C, H, W), dtype=jnp.float32)
    target = jax.random.randint(k2, (N, 1, H, W), 0, C, dtype=jnp.int32)
    ignore_mask = jax.random.bernoulli(k3, 0.1, (N, 1, H, W))
    target = jnp.where(ignore_mask, IGNORE_INDEX, target)
    class_weight = jnp.array([1.0, 1.0], jnp.float32)

    loss = jax.block_until_ready(ce_loss(output, target, class_weight))
    ref = _ce_loss_reference(output, target, class_weight)
    assert jnp.allclose(loss, ref, atol=1e-5, rtol=1e-5), (loss, ref)

    # Case 2: more classes, non-uniform weights, spatial extent NOT a multiple
    # of the lane tile and a forced small tile -> exercises the multi-step
    # resident accumulator and the in-kernel tail masking (no padding).
    k4, k5, k6 = jax.random.split(jax.random.PRNGKey(1), 3)
    N2, C2, H2, W2 = 2, 4, 16, 20          # H*W = 320
    output2 = jax.random.normal(k4, (N2, C2, H2, W2), dtype=jnp.float32)
    target2 = jax.random.randint(k5, (N2, 1, H2, W2), 0, C2, dtype=jnp.int32)
    ignore_mask2 = jax.random.bernoulli(k6, 0.15, (N2, 1, H2, W2))
    target2 = jnp.where(ignore_mask2, IGNORE_INDEX, target2)
    class_weight2 = jnp.array([0.5, 2.0, 1.0, 3.0], jnp.float32)

    loss2 = jax.block_until_ready(
        ce_loss(output2, target2, class_weight2, tile_hw=128))
    ref2 = _ce_loss_reference(output2, target2, class_weight2)
    assert jnp.allclose(loss2, ref2, atol=1e-5, rtol=1e-5), (loss2, ref2)

    print("KERNEL_OK")
</pallas_src>

<mosaic_0001>
module attributes {stable_mosaic.version = 11 : i64} {
  func.func @_ce_kernel(%arg0: i32, %arg1: i32, %arg2: memref<1x2x256xf32, #tpu.memory_space<vmem>>, %arg3: memref<1x1x256xi32, #tpu.memory_space<vmem>>, %arg4: memref<2xf32, #tpu.memory_space<smem>>, %arg5: memref<1x1x256xf32, #tpu.memory_space<vmem>>, %arg6: memref<1x1x256xf32, #tpu.memory_space<vmem>>) attributes {dimension_semantics = [#tpu.dimension_semantics<parallel>, #tpu.dimension_semantics<arbitrary>], iteration_bounds = array<i64: 2, 1>, scalar_prefetch = 0 : i64, scratch_operands = 0 : i64, tpu.core_type = #tpu.core_type<tc>, window_params = [{transform_indices = @transform_0, window_bounds = array<i64: 1, 2, 256>}, {transform_indices = @transform_1, window_bounds = array<i64: 1, 1, 256>}, {transform_indices = @transform_2, window_bounds = array<i64: 2>}, {transform_indices = @transform_3, window_bounds = array<i64: 1, 1, 256>}, {transform_indices = @transform_4, window_bounds = array<i64: 1, 1, 256>}]} {
    %c0 = arith.constant 0 : index
    %c0_0 = arith.constant 0 : index
    %c0_1 = arith.constant 0 : index
    %0 = vector.load %arg2[%c0, %c0_0, %c0_1] : memref<1x2x256xf32, #tpu.memory_space<vmem>>, vector<1x2x256xf32>
    %c0_2 = arith.constant 0 : index
    %c0_3 = arith.constant 0 : index
    %c0_4 = arith.constant 0 : index
    %1 = vector.load %arg3[%c0_2, %c0_3, %c0_4] : memref<1x1x256xi32, #tpu.memory_space<vmem>>, vector<1x1x256xi32>
    %cst = arith.constant dense<0xFF800000> : vector<1x256xf32>
    %2 = vector.multi_reduction <maximumf>, %0, %cst [1] : vector<1x2x256xf32> to vector<1x256xf32>
    %3 = vector.shape_cast %2 : vector<1x256xf32> to vector<1x1x256xf32>
    %4 = vector.broadcast %3 : vector<1x1x256xf32> to vector<1x2x256xf32>
    %5 = arith.subf %0, %4 : vector<1x2x256xf32>
    %6 = math.exp %5 : vector<1x2x256xf32>
    %cst_5 = arith.constant dense<0.000000e+00> : vector<1x256xf32>
    %7 = vector.multi_reduction <add>, %6, %cst_5 [1] : vector<1x2x256xf32> to vector<1x256xf32>
    %8 = vector.shape_cast %7 : vector<1x256xf32> to vector<1x1x256xf32>
    %9 = math.log %8 : vector<1x1x256xf32>
    %10 = arith.addf %3, %9 : vector<1x1x256xf32>
    %11 = tpu.iota {dimensions = array<i32: 1>} : vector<1x2x256xi32>
    %12 = vector.broadcast %1 : vector<1x1x256xi32> to vector<1x2x256xi32>
    %13 = arith.cmpi eq, %11, %12 : vector<1x2x256xi32>
    %cst_6 = arith.constant 0.000000e+00 : f32
    %14 = vector.broadcast %cst_6 : f32 to vector<1x2x256xf32>
    %15 = arith.select %13, %0, %14 : vector<1x2x256xi1>, vector<1x2x256xf32>
    %cst_7 = arith.constant dense<0.000000e+00> : vector<1x256xf32>
    %16 = vector.multi_reduction <add>, %15, %cst_7 [1] : vector<1x2x256xf32> to vector<1x256xf32>
    %17 = vector.shape_cast %16 : vector<1x256xf32> to vector<1x1x256xf32>
    %cst_8 = arith.constant 0.000000e+00 : f32
    %18 = vector.broadcast %cst_8 : f32 to vector<1x1x256xf32>
    %c0_i32 = arith.constant 0 : i32
    %19 = vector.broadcast %c0_i32 : i32 to vector<1x1x256xi32>
    %20 = arith.cmpi eq, %1, %19 : vector<1x1x256xi32>
    %c0_9 = arith.constant 0 : index
    %21 = memref.load %arg4[%c0_9] : memref<2xf32, #tpu.memory_space<smem>>
    %22 = vector.broadcast %21 : f32 to vector<1x1x256xf32>
    %23 = arith.select %20, %22, %18 : vector<1x1x256xi1>, vector<1x1x256xf32>
    %c1_i32 = arith.constant 1 : i32
    %24 = vector.broadcast %c1_i32 : i32 to vector<1x1x256xi32>
    %25 = arith.cmpi eq, %1, %24 : vector<1x1x256xi32>
    %c1 = arith.constant 1 : index
    %26 = memref.load %arg4[%c1] : memref<2xf32, #tpu.memory_space<smem>>
    %27 = vector.broadcast %26 : f32 to vector<1x1x256xf32>
    %28 = arith.select %25, %27, %23 : vector<1x1x256xi1>, vector<1x1x256xf32>
    %c256_i32 = arith.constant 256 : i32
    %29 = arith.muli %arg1, %c256_i32 : i32
    %30 = tpu.iota {dimensions = array<i32: 2>} : vector<1x1x256xi32>
    %31 = vector.broadcast %29 : i32 to vector<1x1x256xi32>
    %32 = arith.addi %31, %30 : vector<1x1x256xi32>
    %c-100_i32 = arith.constant -100 : i32
    %33 = vector.broadcast %c-100_i32 : i32 to vector<1x1x256xi32>
    %34 = arith.cmpi ne, %1, %33 : vector<1x1x256xi32>
    %c256_i32_10 = arith.constant 256 : i32
    %35 = vector.broadcast %c256_i32_10 : i32 to vector<1x1x256xi32>
    %36 = arith.cmpi slt, %32, %35 : vector<1x1x256xi32>
    %37 = arith.andi %34, %36 : vector<1x1x256xi1>
    %38 = arith.subf %10, %17 : vector<1x1x256xf32>
    %39 = arith.mulf %28, %38 : vector<1x1x256xf32>
    %cst_11 = arith.constant 0.000000e+00 : f32
    %40 = vector.broadcast %cst_11 : f32 to vector<1x1x256xf32>
    %41 = arith.select %37, %39, %40 : vector<1x1x256xi1>, vector<1x1x256xf32>
    %cst_12 = arith.constant 0.000000e+00 : f32
    %42 = vector.broadcast %cst_12 : f32 to vector<1x1x256xf32>
    %43 = arith.select %37, %28, %42 : vector<1x1x256xi1>, vector<1x1x256xf32>
    %c0_i32_13 = arith.constant 0 : i32
    %44 = arith.cmpi eq, %arg1, %c0_i32_13 : i32
    %45 = arith.extui %44 : i1 to i32
    %c0_i32_14 = arith.constant 0 : i32
    %46 = arith.cmpi ne, %45, %c0_i32_14 : i32
    scf.if %46 {
      %cst_27 = arith.constant 0.000000e+00 : f32
      %53 = vector.broadcast %cst_27 : f32 to vector<1x1x256xf32>
      %c0_28 = arith.constant 0 : index
      %c0_29 = arith.constant 0 : index
      %c0_30 = arith.constant 0 : index
      %54 = vector.load %arg5[%c0_28, %c0_29, %c0_30] : memref<1x1x256xf32, #tpu.memory_space<vmem>>, vector<1x1x256xf32>
      tpu.vector_store %arg5[%c0_28, %c0_29, %c0_30], %53 {strides = array<i32>} : memref<1x1x256xf32, #tpu.memory_space<vmem>>, vector<1x1x256xf32>,
      %cst_31 = arith.constant 0.000000e+00 : f32
      %55 = vector.broadcast %cst_31 : f32 to vector<1x1x256xf32>
      %c0_32 = arith.constant 0 : index
      %c0_33 = arith.constant 0 : index
      %c0_34 = arith.constant 0 : index
      %56 = vector.load %arg6[%c0_32, %c0_33, %c0_34] : memref<1x1x256xf32, #tpu.memory_space<vmem>>, vector<1x1x256xf32>
      tpu.vector_store %arg6[%c0_32, %c0_33, %c0_34], %55 {strides = array<i32>} : memref<1x1x256xf32, #tpu.memory_space<vmem>>, vector<1x1x256xf32>,
    } else {
    }
    %c0_15 = arith.constant 0 : index
    %c0_16 = arith.constant 0 : index
    %c0_17 = arith.constant 0 : index
    %47 = vector.load %arg5[%c0_15, %c0_16, %c0_17] : memref<1x1x256xf32, #tpu.memory_space<vmem>>, vector<1x1x256xf32>
    %48 = arith.addf %47, %41 : vector<1x1x256xf32>
    %c0_18 = arith.constant 0 : index
    %c0_19 = arith.constant 0 : index
    %c0_20 = arith.constant 0 : index
    %49 = vector.load %arg5[%c0_18, %c0_19, %c0_20] : memref<1x1x256xf32, #tpu.memory_space<vmem>>, vector<1x1x256xf32>
    tpu.vector_store %arg5[%c0_18, %c0_19, %c0_20], %48 {strides = array<i32>} : memref<1x1x256xf32, #tpu.memory_space<vmem>>, vector<1x1x256xf32>,
    %c0_21 = arith.constant 0 : index
    %c0_22 = arith.constant 0 : index
    %c0_23 = arith.constant 0 : index
    %50 = vector.load %arg6[%c0_21, %c0_22, %c0_23] : memref<1x1x256xf32, #tpu.memory_space<vmem>>, vector<1x1x256xf32>
    %51 = arith.addf %50, %43 : vector<1x1x256xf32>
    %c0_24 = arith.constant 0 : index
    %c0_25 = arith.constant 0 : index
    %c0_26 = arith.constant 0 : index
    %52 = vector.load %arg6[%c0_24, %c0_25, %c0_26] : memref<1x1x256xf32, #tpu.memory_space<vmem>>, vector<1x1x256xf32>
    tpu.vector_store %arg6[%c0_24, %c0_25, %c0_26], %51 {strides = array<i32>} : memref<1x1x256xf32, #tpu.memory_space<vmem>>, vector<1x1x256xf32>,
    return
  }
  func.func @transform_0(%arg0: i32, %arg1: i32) -> (i32, i32, i32) {
    %c0_i32 = arith.constant 0 : i32
    %c0_i32_0 = arith.constant 0 : i32
    return %arg0, %c0_i32, %arg1 : i32, i32, i32
  }
  func.func @transform_1(%arg0: i32, %arg1: i32) -> (i32, i32, i32) {
    %c0_i32 = arith.constant 0 : i32
    %c0_i32_0 = arith.constant 0 : i32
    return %arg0, %c0_i32, %arg1 : i32, i32, i32
  }
  func.func @transform_2(%arg0: i32, %arg1: i32) -> i32 {
    %c0_i32 = arith.constant 0 : i32
    %c0_i32_0 = arith.constant 0 : i32
    return %c0_i32 : i32
  }
  func.func @transform_3(%arg0: i32, %arg1: i32) -> (i32, i32, i32) {
    %c0_i32 = arith.constant 0 : i32
    %c0_i32_0 = arith.constant 0 : i32
    %c0_i32_1 = arith.constant 0 : i32
    return %arg0, %c0_i32, %c0_i32_0 : i32, i32, i32
  }
  func.func @transform_4(%arg0: i32, %arg1: i32) -> (i32, i32, i32) {
    %c0_i32 = arith.constant 0 : i32
    %c0_i32_0 = arith.constant 0 : i32
    %c0_i32_1 = arith.constant 0 : i32
    return %arg0, %c0_i32, %c0_i32_0 : i32, i32, i32
  }
}

</mosaic_0001>

<llo_original>
// kernel: tpu_custom_call.1
$region0: #{tpu_custom_call.1}
  #allocation0 [shape = 'u32[]', space=smem, size = 0x4, offset = 0x4, fixed_abs, tag = 'smem constant byte address 0x4 - core index']
  #allocation1 [shape = 'u32[144,128]{1,0:T(1,128)}', space=vmem, size = 0x12000, scoped, tag = 'internal scratch']
  %s0 = inlined_call_operand.hbm [shape: f32[2,2,256], index: 0, kind: input, shape index: {}]
  %s1 = inlined_call_operand.hbm [shape: s32[2,1,256], index: 1, kind: input, shape index: {}]
  %s2 = inlined_call_operand.vmem [shape: f32[2], index: 2, kind: input, shape index: {}]
  %s3 = inlined_call_operand.hbm [shape: f32[2,1,256], index: 3, kind: output, shape index: {0}]
  %s4 = inlined_call_operand.hbm [shape: f32[2,1,256], index: 4, kind: output, shape index: {1}]
  %5 = xla_tuple %s3, %s4
  %s6 = sld [smem:[#allocation0]]
  $region69: #{tpu_custom_call.1} parent=0
    _
  %s8 = ssub.s32 1, %s6
  %s9 = scalar_select 0, %s8, %s6
  $region1: #{tpu_custom_call.1} parent=0
    #allocation2 [shape = 'u8[4096]{0}', space=vmem, size = 0x1000, scoped, tag = 'input window, operand 0']
    #allocation3 [shape = 's32[2]{0}', space=sflag, size = 0x8, scoped, tag = 'scoped memory for tpu_custom_call.1']
    #allocation4 [shape = 's32[2]{0}', space=sflag, size = 0x8, scoped, tag = 'scoped memory for tpu_custom_call.1']
    #allocation5 [shape = 's32[2]{0}', space=sflag, size = 0x8, scoped, tag = 'scoped memory for tpu_custom_call.1']
    #allocation6 [shape = 'u8[2048]{0}', space=vmem, size = 0x800, scoped, tag = 'input window, operand 1']
    #allocation7 [shape = 's32[2]{0}', space=sflag, size = 0x8, scoped, tag = 'scoped memory for tpu_custom_call.1']
    #allocation8 [shape = 'u8[512]{0}', space=smem, size = 0x200, scoped, tag = 'input window, operand 2, single buffered']
    #allocation9 [shape = 'u8[2048]{0}', space=vmem, size = 0x800, scoped, tag = 'output window, operand 0']
    #allocation10 [shape = 'u8[2048]{0}', space=vmem, size = 0x800, scoped, tag = 'output window, operand 1']
    #allocation11 [shape = 's32[2]{0}', space=sflag, size = 0x8, scoped, tag = 'scoped memory for tpu_custom_call.1']
    %10 = vsyncpa [#allocation3], 0
    %s11 = scalar_lea.sflag [#allocation3], 1
    %12 = vsyncpa %s11, 0
    %13 = vsyncpa [#allocation7], 0
    %s14 = scalar_lea.sflag [#allocation7], 1
    %15 = vsyncpa %s14, 0
    %16 = vsyncpa [#allocation5], 0
    %17 = vsyncpa [#allocation4], 0
    %s18 = scalar_lea.sflag [#allocation4], 1
    %19 = vsyncpa %s18, 0
    %20 = vsyncpa [#allocation11], 0
    %s21 = scalar_lea.sflag [#allocation11], 1
    %22 = vsyncpa %s21, 0
    loop: start=0, step=1, limit=4
    $region2: #{tpu_custom_call.1} parent=1 // loop_pre_header
      _
    $region3: #{tpu_custom_call.1} parent=1 // loop_header
      %s24 = sphi 0, %s28
      %p25 = scmp.ge.s32.totalorder %s24, 4
      %s31 = sphi 0, %s43
      %s32 = sphi 0, %s39
      %s33 = sphi 0, %s31
      %s34 = sphi 0, %s32
      %s35 = sphi 0, %s33
      %s36 = sphi 0, %s34
      %s48 = sphi 0, %s50
      %s51 = sphi 0, %s48
      %s52 = sphi 0, %s51
      %s68 = sphi 0, %s52
      %s76 = sphi 0, %s78
      %s79 = sphi 0, %s76
      %s80 = sphi 0, %s79
      %s96 = sphi 0, %s80
      %s100 = sphi 0, %s100
      %s102 = sphi 0, %s100
      %s103 = sphi 0, %s102
      %s117 = sphi 0, %s103
      %s123 = sphi 0, %s125
      %s126 = sphi 0, %s123
      %s127 = sphi 0, %s126
      %s143 = sphi 0, %s127
      %s149 = sphi 0, %s151
      %s152 = sphi 0, %s149
      %s153 = sphi 0, %s152
      %s169 = sphi 0, %s153
    $region4: #{tpu_custom_call.1} parent=1 // loop_header_branch
      %27 = sbr.rel (%p25) target = $region8
    $region5: #{tpu_custom_call.1} parent=1 // loop_body
      %s29 = ssub.s32 %s24, 1
      %s30 = ssub.s32 %s24, 2
      %s37 = sadd.s32 1, %s32
      %p38 = scmp.ge.s32.totalorder %s37, 1
      %s39 = scalar_select %p38, 0, %s37
      %s40 = sadd.s32 1, %s31
      %s41 = scalar_select %p38, %s40, %s31
      %p42 = scmp.ge.s32.totalorder %s41, 2
      %s43 = scalar_select %p42, 0, %s41
      %s44 = ssub.s32 %s31, %s43
      %s45 = ssub.s32 %s32, %s39
      %s46 = sor.u32 %s44, %s45
      %p47 = scmp.eq.s32.totalorder %s46, 0
      %s49 = sadd.s32 %s48, 1
      %s50 = scalar_select %p47, %s48, %s49
      %p53 = pneg %p47
      %p54 = scmp.eq.s32.totalorder %s24, 1
      %p55 = por %p53, %p54
      %p56 = scmp.ne.s32.totalorder %s48, %s51
      %p57 = scmp.eq.s32.totalorder %s24, 0
      %p58 = por %p56, %p57
      %p59 = scmp.ne.s32.totalorder %s48, %s51
      %p60 = scmp.eq.s32.totalorder %s29, 1
      %p61 = por %p59, %p60
      %p62 = scmp.ne.s32.totalorder %s51, %s52
      %p63 = scmp.eq.s32.totalorder %s29, 0
      %p64 = por %p62, %p63
      %p65 = scmp.ne.s32.totalorder %s51, %s52
      %p66 = scmp.eq.s32.totalorder %s30, 1
      %p67 = por %p65, %p66
      %p69 = scmp.ne.s32.totalorder %s52, %s68
      %p70 = scmp.eq.s32.totalorder %s30, 0
      %p71 = por %p69, %p70
      %s72 = ssub.s32 %s31, %s43
      %s73 = ssub.s32 %s32, %s39
      %s74 = sor.u32 %s72, %s73
      %p75 = scmp.eq.s32.totalorder %s74, 0
      %s77 = sadd.s32 %s76, 1
      %s78 = scalar_select %p75, %s76, %s77
      %p81 = pneg %p75
      %p82 = scmp.eq.s32.totalorder %s24, 1
      %p83 = por %p81, %p82
      %p84 = scmp.ne.s32.totalorder %s76, %s79
      %p85 = scmp.eq.s32.totalorder %s24, 0
      %p86 = por %p84, %p85
      %p87 = scmp.ne.s32.totalorder %s76, %s79
      %p88 = scmp.eq.s32.totalorder %s29, 1
      %p89 = por %p87, %p88
      %p90 = scmp.ne.s32.totalorder %s79, %s80
      %p91 = scmp.eq.s32.totalorder %s29, 0
      %p92 = por %p90, %p91
      %p93 = scmp.ne.s32.totalorder %s79, %s80
      %p94 = scmp.eq.s32.totalorder %s30, 1
      %p95 = por %p93, %p94
      %p97 = scmp.ne.s32.totalorder %s80, %s96
      %p98 = scmp.eq.s32.totalorder %s30, 0
      %p99 = por %p97, %p98
      %s101 = sadd.s32 %s100, 1
      %p104 = scmp.eq.s32.totalorder %s24, 1
      %p105 = scmp.ne.s32.totalorder %s100, %s102
      %p106 = scmp.eq.s32.totalorder %s24, 0
      %p107 = por %p105, %p106
      %p108 = scmp.ne.s32.totalorder %s100, %s102
      %p109 = scmp.eq.s32.totalorder %s29, 1
      %p110 = por %p108, %p109
      %p111 = scmp.ne.s32.totalorder %s102, %s103
      %p112 = scmp.eq.s32.totalorder %s29, 0
      %p113 = por %p111, %p112
      %p114 = scmp.ne.s32.totalorder %s102, %s103
      %p115 = scmp.eq.s32.totalorder %s30, 1
      %p116 = por %p114, %p115
      %p118 = scmp.ne.s32.totalorder %s103, %s117
      %p119 = scmp.eq.s32.totalorder %s30, 0
      %p120 = por %p118, %p119
      %s121 = ssub.s32 %s31, %s43
      %p122 = scmp.eq.s32.totalorder %s121, 0
      %s124 = sadd.s32 %s123, 1
      %s125 = scalar_select %p122, %s123, %s124
      %p128 = pneg %p122
      %p129 = scmp.eq.s32.totalorder %s24, 1
      %p130 = por %p128, %p129
      %p131 = scmp.ne.s32.totalorder %s123, %s126
      %p132 = scmp.eq.s32.totalorder %s24, 0
      %p133 = por %p131, %p132
      %p134 = scmp.ne.s32.totalorder %s123, %s126
      %p135 = scmp.eq.s32.totalorder %s29, 1
      %p136 = por %p134, %p135
      %p137 = scmp.ne.s32.totalorder %s126, %s127
      %p138 = scmp.eq.s32.totalorder %s29, 0
      %p139 = por %p137, %p138
      %p140 = scmp.ne.s32.totalorder %s126, %s127
      %p141 = scmp.eq.s32.totalorder %s30, 1
      %p142 = por %p140, %p141
      %p144 = scmp.ne.s32.totalorder %s127, %s143
      %p145 = scmp.eq.s32.totalorder %s30, 0
      %p146 = por %p144, %p145
      %s147 = ssub.s32 %s31, %s43
      %p148 = scmp.eq.s32.totalorder %s147, 0
      %s150 = sadd.s32 %s149, 1
      %s151 = scalar_select %p148, %s149, %s150
      %p154 = pneg %p148
      %p155 = scmp.eq.s32.totalorder %s24, 1
      %p156 = por %p154, %p155
      %p157 = scmp.ne.s32.totalorder %s149, %s152
      %p158 = scmp.eq.s32.totalorder %s24, 0
      %p159 = por %p157, %p158
      %p160 = scmp.ne.s32.totalorder %s149, %s152
      %p161 = scmp.eq.s32.totalorder %s29, 1
      %p162 = por %p160, %p161
      %p163 = scmp.ne.s32.totalorder %s152, %s153
      %p164 = scmp.eq.s32.totalorder %s29, 0
      %p165 = por %p163, %p164
      %p166 = scmp.ne.s32.totalorder %s152, %s153
      %p167 = scmp.eq.s32.totalorder %s30, 1
      %p168 = por %p166, %p167
      %p170 = scmp.ne.s32.totalorder %s153, %s169
      %p171 = scmp.eq.s32.totalorder %s30, 0
      %p172 = por %p170, %p171
      %p173 = scmp.le.s32.totalorder 1, %s24
      %p174 = scmp.lt.s32.totalorder %s24, 3
      %p175 = pnand %p173, %p174
      %p176 = pneg %p175
      // Predicated region
      $region9: #{tpu_custom_call.1} parent=5 // pred_check
        _
      $region10: #{tpu_custom_call.1} parent=5 // pred_check_branch
        %178 = sbr.rel (%p175) target = $region12
      $region11: #{tpu_custom_call.1} parent=5 // pred_region
        %s179 = ssub.s32 %s24, 1
        // Predicated region
        $region13: #{tpu_custom_call.1} parent=11 // pred_check
          %p180 = pneg %p113
        $region14: #{tpu_custom_call.1} parent=11 // pred_check_branch
          %182 = sbr.rel (%p180) target = $region16
        $region15: #{tpu_custom_call.1} parent=11 // pred_region
          %s184 = ssub.s32 16, 16
          %185 = vsyncadd [#allocation5], %s184
          %s187 = sshll.u32 %s2, 4
          %s188 = int_to_ptr.vmem [resolvable:$true] %s187
          %190 = dma.vmem_to_smem %s188, 16, [#allocation8], [#allocation5]
        $region16: #{tpu_custom_call.1} parent=11 // pred_fallthru
          _
      $region12: #{tpu_custom_call.1} parent=5 // pred_fallthru
        _
      %p191 = scmp.lt.s32.totalorder %s24, 2
      // Predicated region
      $region17: #{tpu_custom_call.1} parent=5 // pred_check
        %p192 = pneg %p191
      $region18: #{tpu_custom_call.1} parent=5 // pred_check_branch
        %194 = sbr.rel (%p192) target = $region20
      $region19: #{tpu_custom_call.1} parent=5 // pred_region
        // Predicated region
        $region21: #{tpu_custom_call.1} parent=19 // pred_check
          %p195 = pneg %p58
        $region22: #{tpu_custom_call.1} parent=19 // pred_check_branch
          %197 = sbr.rel (%p195) target = $region24
        $region23: #{tpu_custom_call.1} parent=19 // pred_region
          %s198 = sand.u32 %s48, 1
          %s199 = scalar_lea.sflag [#allocation3], %s198
          %s200 = sand.u32 %s48, 1
          %s201 = smul.addr %s200, 4
          %s202 = scalar_lea.vmem [#allocation2], %s201
          %s203 = smul.u32 2, %s32
          %s205 = ssub.s32 64, 64
          %206 = vsyncadd %s199, %s205
          %s207 = smul.addr %s31, 2
          %s208 = sadd.s32 %s203, %s207
          %s209 = smul.addr %s208, 32
          %s210 = scalar_lea.hbm %s0, %s209
          %s212 = sshll.u32 %s202, 4
          %s213 = int_to_ptr.vmem [resolvable:$true] %s212
          %215 = dma.hbm_to_vmem [thread:$0]  %s210, 64, %s213, %s199
        $region24: #{tpu_custom_call.1} parent=19 // pred_fallthru
          _
        // Predicated region
        $region25: #{tpu_custom_call.1} parent=19 // pred_check
          %p216 = pneg %p86
        $region26: #{tpu_custom_call.1} parent=19 // pred_check_branch
          %218 = sbr.rel (%p216) target = $region28
        $region27: #{tpu_custom_call.1} parent=19 // pred_region
          %s219 = sand.u32 %s76, 1
          %s220 = scalar_lea.sflag [#allocation7], %s219
          %s221 = sand.u32 %s76, 1
          %s222 = smul.addr %s221, 2
          %s223 = scalar_lea.vmem [#allocation6], %s222
          %s224 = smul.u32 2, %s32
          %s226 = ssub.s32 32, 32
          %227 = vsyncadd %s220, %s226
          %s228 = smul.addr %s31, 2
          %s229 = sadd.s32 %s224, %s228
          %s230 = smul.addr %s229, 16
          %s231 = scalar_lea.hbm %s1, %s230
          %s233 = sshll.u32 %s223, 4
          %s234 = int_to_ptr.vmem [resolvable:$true] %s233
          %236 = dma.hbm_to_vmem [thread:$0]  %s231, 32, %s234, %s220
        $region28: #{tpu_custom_call.1} parent=19 // pred_fallthru
          _
      $region20: #{tpu_custom_call.1} parent=5 // pred_fallthru
        _
      %p237 = scmp.le.s32.totalorder 1, %s24
      %p238 = scmp.lt.s32.totalorder %s24, 3
      %p239 = pnand %p237, %p238
      %p240 = pneg %p239
      // Predicated region
      $region29: #{tpu_custom_call.1} parent=5 // pred_check
        _
      $region30: #{tpu_custom_call.1} parent=5 // pred_check_branch
        %242 = sbr.rel (%p239) target = $region32
      $region31: #{tpu_custom_call.1} parent=5 // pred_region
        %s243 = ssub.s32 %s24, 1
        %s244 = sand.u32 %s51, 1
        %s245 = scalar_lea.sflag [#allocation3], %s244
        %s246 = sand.u32 %s51, 1
        %s247 = smul.addr %s246, 4
        %s248 = scalar_lea.vmem [#allocation2], %s247
        // Predicated region
        $region33: #{tpu_custom_call.1} parent=31 // pred_check
          %p249 = pneg %p64
        $region34: #{tpu_custom_call.1} parent=31 // pred_check_branch
          %251 = sbr.rel (%p249) target = $region36
        $region35: #{tpu_custom_call.1} parent=31 // pred_region
          %252 = dma.done %s245, 64
        $region36: #{tpu_custom_call.1} parent=31 // pred_fallthru
          _
        %s253 = sand.u32 %s79, 1
        %s254 = scalar_lea.sflag [#allocation7], %s253
        %s255 = sand.u32 %s79, 1
        %s256 = smul.addr %s255, 2
        %s257 = scalar_lea.vmem [#allocation6], %s256
        // Predicated region
        $region37: #{tpu_custom_call.1} parent=31 // pred_check
          %p258 = pneg %p92
        $region38: #{tpu_custom_call.1} parent=31 // pred_check_branch
          %260 = sbr.rel (%p258) target = $region40
        $region39: #{tpu_custom_call.1} parent=31 // pred_region
          %261 = dma.done %s254, 32
        $region40: #{tpu_custom_call.1} parent=31 // pred_fallthru
          _
        // Predicated region
        $region41: #{tpu_custom_call.1} parent=31 // pred_check
          %p262 = pneg %p113
        $region42: #{tpu_custom_call.1} parent=31 // pred_check_branch
          %264 = sbr.rel (%p262) target = $region44
        $region43: #{tpu_custom_call.1} parent=31 // pred_region
          %265 = dma.done [#allocation5], 16
        $region44: #{tpu_custom_call.1} parent=31 // pred_fallthru
          _
        %266 = sfence
        %s267 = sand.u32 %s51, 1
        %s268 = scalar_lea.sflag [#allocation3], %s267
        %s269 = sand.u32 %s51, 1
        %s270 = smul.addr %s269, 4
        %s271 = scalar_lea.vmem [#allocation2], %s270
        %p272 = pneg %p64
        %p273 = pneg %p61
        %s274 = sand.u32 %s79, 1
        %s275 = scalar_lea.sflag [#allocation7], %s274
        %s276 = sand.u32 %s79, 1
        %s277 = smul.addr %s276, 2
        %s278 = scalar_lea.vmem [#allocation6], %s277
        %p279 = pneg %p92
        %p280 = pneg %p89
        %p281 = pneg %p113
        %p282 = pneg %p110
        %p283 = pneg %p139
        %p284 = pneg %p136
        %s285 = sand.u32 %s126, 1
        %s286 = scalar_lea.sflag [#allocation4], %s285
        %s287 = sand.u32 %s126, 1
        %s288 = smul.addr %s287, 2
        %s289 = scalar_lea.vmem [#allocation9], %s288
        %p290 = pneg %p165
        %p291 = pneg %p162
        %s292 = sand.u32 %s152, 1
        %s293 = scalar_lea.sflag [#allocation11], %s292
        %s294 = sand.u32 %s152, 1
        %s295 = smul.addr %s294, 2
        %s296 = scalar_lea.vmem [#allocation10], %s295
        %s297 = smul.u32 2, %s34
        %s298 = smul.u32 2, %s34
        %v299 = vld [vmem:[%s248] sm:$0xf]
        %v300 = vld [vmem:[%s257] sm:$0x3]
        %v303 = vunpack.c.l.s4 1983009808
        %v304 = vunpack.c.0.s8 %v303
        %v305 = vlaneseq
        %v306 = vshrl.u32 %v305, 7
        %v307 = vsub.s32 %v304, %v306
        %v308 = vrot.slane %v299, %v307
        %v309 = vcombine.high %v308, %v308
        %vm312 = vcmask 1041408
        %v313 = vsel %vm312, %v308, -inf
        %v314 = vrot.slane %v313, 4
        %v315 = vmax.f32 %v313, %v314
        %v316 = vrot.slane %v315, 2
        %v317 = vmax.f32 %v315, %v316
        %v318 = vrot.slane %v317, 1
        %v319 = vmax.f32 %v317, %v318
        %v320 = vsel %vm312, %v309, -inf
        %v321 = vrot.slane %v320, 4
        %v322 = vmax.f32 %v320, %v321
        %v323 = vrot.slane %v322, 2
        %v324 = vmax.f32 %v322, %v323
        %v325 = vrot.slane %v324, 1
        %v326 = vmax.f32 %v324, %v325
        %v329 = vcombine.low %v319, %v326
        %v331 = vunpack.c.l.s4 1983009808
        %v332 = vunpack.c.0.s8 %v331
        %v333 = vlaneseq
        %v334 = vshrl.u32 %v333, 7
        %v335 = vsub.s32 %v332, %v334
        %v336 = vrot.slane %v329, %v335
        %v338 = vsub.f32 %v299, %v336
        %v339 = vmul.f32 %v338, 1.442695
        %v340 = vpow.pop %v339
        %v343 = vunpack.c.l.s4 1983009808
        %v344 = vunpack.c.0.s8 %v343
        %v345 = vlaneseq
        %v346 = vshrl.u32 %v345, 7
        %v347 = vsub.s32 %v344, %v346
        %v348 = vrot.slane %v340, %v347
        %v349 = vcombine.high %v348, %v348
        %v352 = vsel %vm312, %v348, 0.0
        %v353 = vrot.slane %v352, 4
        %v354 = vadd.f32 %v352, %v353
        %v355 = vrot.slane %v354, 2
        %v356 = vadd.f32 %v354, %v355
        %v357 = vrot.slane %v356, 1
        %v358 = vadd.f32 %v356, %v357
        %v359 = vsel %vm312, %v349, 0.0
        %v360 = vrot.slane %v359, 4
        %v361 = vadd.f32 %v359, %v360
        %v362 = vrot.slane %v361, 2
        %v363 = vadd.f32 %v361, %v362
        %v364 = vrot.slane %v363, 1
        %v365 = vadd.f32 %v363, %v364
        %v366 = vlog2.pop %v358
        %v367 = vmul.f32 %v366, 0.6931472
        %v368 = vlog2.pop %v365
        %v369 = vmul.f32 %v368, 0.6931472
        %v370 = vadd.f32 %v319, %v367
        %v371 = vadd.f32 %v326, %v369
        %v372 = vlaneseq
        %v373 = vshrl.u32 %v372, 7
        %v374 = vlaneseq
        %v375 = vshrl.u32 %v374, 7
        %v376 = vsub.s32 0, %v375
        %v377 = vrot.slane %v300, %v376
        %v378 = vlaneseq
        %v379 = vshrl.u32 %v378, 7
        %v380 = vsub.s32 1, %v379
        %v381 = vrot.slane %v300, %v380
        %vm382 = vcmp.eq.s32.totalorder %v373, %v377
        %vm383 = vcmp.eq.s32.totalorder %v373, %v381
        %v384 = vsel %vm382, %v308, 0.0
        %v385 = vsel %vm383, %v309, 0.0
        %v386 = vsel %vm312, %v384, 0.0
        %v387 = vrot.slane %v386, 4
        %v388 = vadd.f32 %v386, %v387
        %v389 = vrot.slane %v388, 2
        %v390 = vadd.f32 %v388, %v389
        %v391 = vrot.slane %v390, 1
        %v392 = vadd.f32 %v390, %v391
        %v393 = vsel %vm312, %v385, 0.0
        %v394 = vrot.slane %v393, 4
        %v395 = vadd.f32 %v393, %v394
        %v396 = vrot.slane %v395, 2
        %v397 = vadd.f32 %v395, %v396
        %v398 = vrot.slane %v397, 1
        %v399 = vadd.f32 %v397, %v398
        %vm400 = vcmp.eq.s32.totalorder %v300, 0
        %s401 = sld [smem:[#allocation8]]
        %v402 = vstv %s401
        %v403 = vsel %vm400, %v402, 0.0
        %vm404 = vcmp.eq.s32.totalorder %v300, 1
        %s405 = sld [smem:[#allocation8 + $0x1]]
        %v406 = vstv %s405
        %v407 = vsel %vm404, %v406, %v403
        %s408 = smul.u32 %s34, 256
        %v409 = vlaneseq
        %v410 = vand.u32 %v409, 127
        %v411 = vadd.s32 %v410, 128
        %v412 = vstv %s408
        %v413 = vadd.s32 %v412, %v410
        %v414 = vadd.s32 %v412, %v411
        %vm415 = vcmp.ne.s32.totalorder %v300, 4294967196
        %vm416 = vcmp.lt.s32.totalorder %v413, 256
        %vm417 = vcmp.lt.s32.totalorder %v414, 256
        %v418 = vsel %vm416, 1, 0
        %v419 = vsel %vm417, 1, 0
        %v420 = vcombine.low %v418, %v419
        %v422 = vunpack.c.l.s4 1966171168
        %v423 = vunpack.c.0.s8 %v422
        %v424 = vlaneseq
        %v425 = vshrl.u32 %v424, 7
        %v426 = vsub.s32 %v423, %v425
        %v427 = vrot.slane %v420, %v426
        %v429 = vunpack.c.l.s4 1966171168
        %v430 = vunpack.c.0.s8 %v429
        %v431 = vlaneseq
        %v432 = vshrl.u32 %v431, 7
        %v433 = vsub.s32 %v430, %v432
        %v434 = vrot.slane %v427, %v433
        %vm435 = vcmp.ne.s32.totalorder %v434, 0
        %vm436 = vmand %vm415, %vm435
        %v437 = vsub.f32 %v370, %v392
        %v438 = vsub.f32 %v371, %v399
        %v441 = vcombine.low %v437, %v438
        %v443 = vunpack.c.l.s4 1966171168
        %v444 = vunpack.c.0.s8 %v443
        %v445 = vlaneseq
        %v446 = vshrl.u32 %v445, 7
        %v447 = vsub.s32 %v444, %v446
        %v448 = vrot.slane %v441, %v447
        %v450 = vunpack.c.l.s4 1966171168
        %v451 = vunpack.c.0.s8 %v450
        %v452 = vlaneseq
        %v453 = vshrl.u32 %v452, 7
        %v454 = vsub.s32 %v451, %v453
        %v455 = vrot.slane %v448, %v454
        %v457 = vmul.f32 %v407, %v455
        %v458 = vsel %vm436, %v457, 0.0
        %v459 = vsel %vm436, %v407, 0.0
        %p460 = scmp.eq.s32.totalorder %s34, 0
        // Predicated region
        $region45: #{tpu_custom_call.1} parent=31 // pred_check
          %p461 = pneg %p460
        $region46: #{tpu_custom_call.1} parent=31 // pred_check_branch
          %463 = sbr.rel (%p461) target = $region48
        $region47: #{tpu_custom_call.1} parent=31 // pred_region
          %v464 = vlaneseq
          %vm465 = vcmp.ge.s32.totalorder %v464, 0
          %vm466 = vcmp.lt.s32.totalorder %v464, 256
          %vm467 = vmand %vm465, %vm466
          %468 = vst.msk [vmem:[%s289] sm:$0x3] %vm467, 0.0
          %469 = vst.msk [vmem:[%s296] sm:$0x3] %vm467, 0.0
        $region48: #{tpu_custom_call.1} parent=31 // pred_fallthru
          _
        %v470 = vld [vmem:[%s289] sm:$0x3]
        %v471 = vadd.f32 %v470, %v458
        %v472 = vlaneseq
        %vm473 = vcmp.ge.s32.totalorder %v472, 0
        %vm474 = vcmp.lt.s32.totalorder %v472, 256
        %vm475 = vmand %vm473, %vm474
        %476 = vst.msk [vmem:[%s289] sm:$0x3] %vm475, %v471
        %v477 = vld [vmem:[%s296] sm:$0x3]
        %v478 = vadd.f32 %v477, %v459
        %479 = vst.msk [vmem:[%s296] sm:$0x3] %vm475, %v478
        %s480 = sand.u32 %s126, 1
        %s481 = scalar_lea.sflag [#allocation4], %s480
        %s482 = sand.u32 %s126, 1
        %s483 = smul.addr %s482, 2
        %s484 = scalar_lea.vmem [#allocation9], %s483
        %s485 = sand.u32 %s152, 1
        %s486 = scalar_lea.sflag [#allocation11], %s485
        %s487 = sand.u32 %s152, 1
        %s488 = smul.addr %s487, 2
        %s489 = scalar_lea.vmem [#allocation10], %s488
        // Predicated region
        $region49: #{tpu_custom_call.1} parent=31 // pred_check
          %p490 = pneg %p136
        $region50: #{tpu_custom_call.1} parent=31 // pred_check_branch
          %492 = sbr.rel (%p490) target = $region52
        $region51: #{tpu_custom_call.1} parent=31 // pred_region
          %s494 = ssub.s32 32, 32
          %495 = vsyncadd %s481, %s494
          %s496 = smul.addr %s33, 2
          %s497 = smul.addr %s496, 16
          %s498 = scalar_lea.hbm %s3, %s497
          %s500 = sshll.u32 %s484, 4
          %s501 = int_to_ptr.vmem [resolvable:$true] %s500
          %503 = dma.vmem_to_hbm [thread:$0]  %s501, 32, %s498, %s481
        $region52: #{tpu_custom_call.1} parent=31 // pred_fallthru
          _
        // Predicated region
        $region53: #{tpu_custom_call.1} parent=31 // pred_check
          %p504 = pneg %p162
        $region54: #{tpu_custom_call.1} parent=31 // pred_check_branch
          %506 = sbr.rel (%p504) target = $region56
        $region55: #{tpu_custom_call.1} parent=31 // pred_region
          %s508 = ssub.s32 32, 32
          %509 = vsyncadd %s486, %s508
          %s510 = smul.addr %s33, 2
          %s511 = smul.addr %s510, 16
          %s512 = scalar_lea.hbm %s4, %s511
          %s514 = sshll.u32 %s489, 4
          %s515 = int_to_ptr.vmem [resolvable:$true] %s514
          %517 = dma.vmem_to_hbm [thread:$0]  %s515, 32, %s512, %s486
        $region56: #{tpu_custom_call.1} parent=31 // pred_fallthru
          _
      $region32: #{tpu_custom_call.1} parent=5 // pred_fallthru
        _
      %p518 = scmp.le.s32.totalorder 2, %s24
      // Predicated region
      $region57: #{tpu_custom_call.1} parent=5 // pred_check
        %p519 = pneg %p518
      $region58: #{tpu_custom_call.1} parent=5 // pred_check_branch
        %521 = sbr.rel (%p519) target = $region60
      $region59: #{tpu_custom_call.1} parent=5 // pred_region
        %s522 = ssub.s32 %s24, 2
        // Predicated region
        $region61: #{tpu_custom_call.1} parent=59 // pred_check
          %p523 = pneg %p142
        $region62: #{tpu_custom_call.1} parent=59 // pred_check_branch
          %525 = sbr.rel (%p523) target = $region64
        $region63: #{tpu_custom_call.1} parent=59 // pred_region
          %s526 = sand.u32 %s127, 1
          %s527 = scalar_lea.sflag [#allocation4], %s526
          %s528 = sand.u32 %s127, 1
          %s529 = smul.addr %s528, 2
          %s530 = scalar_lea.vmem [#allocation9], %s529
          %531 = dma.done %s527, 32
        $region64: #{tpu_custom_call.1} parent=59 // pred_fallthru
          _
        // Predicated region
        $region65: #{tpu_custom_call.1} parent=59 // pred_check
          %p532 = pneg %p168
        $region66: #{tpu_custom_call.1} parent=59 // pred_check_branch
          %534 = sbr.rel (%p532) target = $region68
        $region67: #{tpu_custom_call.1} parent=59 // pred_region
          %s535 = sand.u32 %s153, 1
          %s536 = scalar_lea.sflag [#allocation11], %s535
          %s537 = sand.u32 %s153, 1
          %s538 = smul.addr %s537, 2
          %s539 = scalar_lea.vmem [#allocation10], %s538
          %540 = dma.done %s536, 32
        $region68: #{tpu_custom_call.1} parent=59 // pred_fallthru
          _
      $region60: #{tpu_custom_call.1} parent=5 // pred_fallthru
        _
    $region6: #{tpu_custom_call.1} parent=1 // loop_footer
      %s28 = sadd.s32 1, %s24
    $region7: #{tpu_custom_call.1} parent=1 // loop_footer_branch
      %23 = sbr.rel target = $region3
    $region8: #{tpu_custom_call.1} parent=1 // loop_exit
      _
    %541 = vsyncpa [#allocation3], 1
    %s542 = scalar_lea.sflag [#allocation3], 1
    %543 = vsyncpa %s542, 1
    %544 = vsyncpa [#allocation7], 1
    %s545 = scalar_lea.sflag [#allocation7], 1
    %546 = vsyncpa %s545, 1
    %547 = vsyncpa [#allocation4], 1
    %s548 = scalar_lea.sflag [#allocation4], 1
    %549 = vsyncpa %s548, 1
    %550 = vsyncpa [#allocation11], 1
    %s551 = scalar_lea.sflag [#allocation11], 1
    %552 = vsyncpa %s551, 1
    %553 = vsyncpa [#allocation5], 1
    %s554 = scalar_lea.sflag [#allocation5], 1
    %555 = vsyncpa %s554, 1

</llo_original>
